<compile_context>
chip_gen: v6e
topology: v6e:2x2x1
jax: 0.10.0
libtpu: 0.0.40
codegen_flags: <defaults>
</compile_context>

<pallas_src>
import jax
import jax.numpy as jnp
from jax.experimental import pallas as pl
from jax.experimental.pallas import tpu as pltpu


def _round_up(v: int, mult: int) -> int:
    return ((v + mult - 1) // mult) * mult


def _vmem_cap_bytes() -> int:
    """~80% of this device's physical VMEM; conservative fallback if unknown."""
    try:
        return int(0.8 * pltpu.get_tpu_info().vmem_capacity_bytes)
    except Exception:
        return 48 << 20   # safe on every generation (v7x has 64 MiB physical)


def _resident_weight_spec(shape, single_buffer: bool) -> pl.BlockSpec:
    """Constant-index weight spec (stays VMEM-resident across the batch grid).

    For large weights, request single buffering: the index_map is constant, so
    double-buffering only doubles resident-weight VMEM without hiding any DMA.
    """
    if single_buffer:
        try:
            return pl.BlockSpec(shape, lambda i: (0, 0),
                                pipeline_mode=pl.Buffered(1))
        except TypeError:
            pass  # jax without pipeline_mode kwarg: fall back to default
    return pl.BlockSpec(shape, lambda i: (0, 0))


# ----------------------------------------------------------------------------
# Kernel
# ----------------------------------------------------------------------------
def toy_linear_kernel(x_ref, w1t_ref, w2t_ref, o_ref):
    # x_ref:   [tb, m]    f32 batch tile (cast to weight dtype on the VPU here,
    #                     instead of a separate wrapper cast pass over HBM)
    # w1t_ref: [m, np_]   resident weight (contraction on natural rows -> MXU)
    # w2t_ref: [np_, kp]  resident weight
    # o_ref:   [tb, kp]   lane-dense output tile (kp % 128 == 0)
    x = x_ref[...].astype(w1t_ref.dtype)
    h = jnp.dot(x, w1t_ref[...], preferred_element_type=jnp.float32)    # [tb,np_]
    h = h.astype(w2t_ref.dtype)                                         # MXU feed
    out = jnp.dot(h, w2t_ref[...], preferred_element_type=jnp.float32)  # [tb,kp]
    o_ref[...] = out.astype(o_ref.dtype)


# ----------------------------------------------------------------------------
# One-time weight preparation (model-load time, NOT per forward call)
# ----------------------------------------------------------------------------
def prepare_weights(w1, w2, *, weight_dtype=jnp.bfloat16):
    """Transpose to [in, out], cast, and pad output dims to lane alignment.

    w1: [n, m] (PyTorch Linear(m, n) weight),  w2: [k, n] (Linear(n, k) weight)
    Returns:
      w1t: [m, n_pad]      (n_pad = round_up(n, 128))
      w2t: [n_pad, k_pad]  (k_pad = round_up(k, 128))
    Padded entries are zero, so results over the true dims are unchanged.
    """
    n, m = w1.shape
    k, n2 = w2.shape
    assert n == n2, "weight shapes inconsistent"
    np_ = _round_up(n, 128)
    kp = _round_up(k, 128)
    w1t = jnp.pad(jnp.asarray(w1).T.astype(weight_dtype),
                  ((0, 0), (0, np_ - n)))
    w2t = jnp.pad(jnp.asarray(w2).T.astype(weight_dtype),
                  ((0, np_ - n), (0, kp - k)))
    return w1t, w2t


# ----------------------------------------------------------------------------
# Forward pass
# ----------------------------------------------------------------------------
def toy_linear_forward(x, w1t, w2t, *, out_features, batch_tile=512,
                       out_dtype=None):
    """Fused forward of ToyLinearModel.

    x:   [B, m]       activations (any float dtype; cast in-kernel)
    w1t: [m, n_pad]   from prepare_weights
    w2t: [n_pad, k_pad]
    returns [B, out_features] in out_dtype (default: x.dtype)
    """
    B, m = x.shape
    m2, np_ = w1t.shape
    np2, kp = w2t.shape
    assert m == m2 and np_ == np2, "weights inconsistent with x / each other"
    k = out_features
    assert k <= kp
    out_dtype = x.dtype if out_dtype is None else out_dtype

    in_b = jnp.dtype(x.dtype).itemsize
    w_b = jnp.dtype(w1t.dtype).itemsize
    out_b = jnp.dtype(out_dtype).itemsize
    f32_b = 4

    # ---- Batch tile: sublane-aligned whenever the batch is actually tiled ---
    tb = min(int(batch_tile), B)
    if tb != B:
        tb = max(16, (tb // 16) * 16)

    # ---- Resident weights: single-buffer when large enough to matter --------
    weight_bytes = (m * np_ + np_ * kp) * w_b
    single_buffer_w = weight_bytes > (8 << 20)
    wbuf = 1 if single_buffer_w else 2

    # ---- VMEM budget (real working set) vs. device cap ----------------------
    cap = _vmem_cap_bytes()

    def vmem_budget(t):
        return (2 * t * m * in_b            # x tiles (double-buffered, f32 in)
                + 2 * t * kp * out_b        # out tiles (double-buffered)
                + wbuf * weight_bytes       # resident weights
                + t * np_ * (f32_b + w_b)   # h: f32 acc + low-precision feed
                + t * kp * f32_b            # second-matmul f32 result
                + (8 << 20))                # Mosaic internal scratch / headroom

    while vmem_budget(tb) > cap and tb > 16:
        tb = max(16, (tb // 2) // 16 * 16)
    vmem_limit = int(max(16 << 20, min(vmem_budget(tb), cap)))

    grid = (pl.cdiv(B, tb),)   # last block masked if tb does not divide B

    # Advisory cost estimate (padded dims; helps XLA schedule around the call).
    flops = 2 * B * m * np_ + 2 * B * np_ * kp
    bytes_accessed = (x.size * in_b + w1t.size * w_b + w2t.size * w_b
                      + B * kp * out_b)
    cost = pl.CostEstimate(flops=flops, transcendentals=0,
                           bytes_accessed=bytes_accessed)

    in_specs = [
        # New f32 activation tile each grid step (cast happens in-kernel).
        pl.BlockSpec((tb, m), lambda i: (i, 0)),
        # Weights: constant block index -> DMA'd once, stay VMEM-resident.
        _resident_weight_spec((m, np_), single_buffer_w),
        _resident_weight_spec((np_, kp), single_buffer_w),
    ]
    out_spec = pl.BlockSpec((tb, kp), lambda i: (i, 0))   # lane-dense stores

    out_padded = pl.pallas_call(
        toy_linear_kernel,
        out_shape=jax.ShapeDtypeStruct((B, kp), out_dtype),
        grid_spec=pltpu.PrefetchScalarGridSpec(
            num_scalar_prefetch=0,
            grid=grid,
            in_specs=in_specs,
            out_specs=out_spec,
        ),
        compiler_params=pltpu.CompilerParams(
            # Batch axis is fully parallel -> megacore / dual-TC sharding.
            dimension_semantics=("parallel",),
            vmem_limit_bytes=vmem_limit,
        ),
        cost_estimate=cost,
    )(x, w1t, w2t)

    # Strip the lane padding off the last dim (no-op when k % 128 == 0).
    return out_padded if kp == k else out_padded[:, :k]


if __name__ == "__main__":
    # Small shapes consistent with the module: Linear(m, n) then Linear(n, k).
    B, m, n, k = 32, 32, 64, 16

    key = jax.random.PRNGKey(0)
    kx, k1, k2 = jax.random.split(key, 3)

    x = jax.random.normal(kx, (B, m), dtype=jnp.float32)
    # Deterministic synthetic weights (PyTorch shapes: W1=[n, m], W2=[k, n]).
    bound1 = 1.0 / (m ** 0.5)
    bound2 = 1.0 / (n ** 0.5)
    w1 = jax.random.uniform(k1, (n, m), jnp.float32, -bound1, bound1)
    w2 = jax.random.uniform(k2, (k, n), jnp.float32, -bound2, bound2)

    # One-time weight prep (transpose / bf16 cast / lane padding), hoisted out
    # of the per-call path per the perf review.
    w1t, w2t = prepare_weights(w1, w2)
    w1t, w2t = jax.block_until_ready((w1t, w2t))

    out = toy_linear_forward(x, w1t, w2t, out_features=k)
    out = jax.block_until_ready(out)

    # Cross-check against the plain-JAX f32 reference of the PyTorch forward.
    # Kernel uses bf16 operands with f32 MXU accumulation -> loose tolerance.
    ref = (x @ w1.T) @ w2.T
    assert out.shape == (B, k)
    assert out.dtype == x.dtype
    max_err = float(jnp.max(jnp.abs(out - ref)))
    assert jnp.allclose(out, ref, atol=5e-2, rtol=5e-2), max_err

    print("KERNEL_OK")
</pallas_src>

<mosaic_0001>
module attributes {stable_mosaic.version = 11 : i64} {
  func.func @toy_linear_kernel(%arg0: i32, %arg1: memref<32x32xf32, #tpu.memory_space<vmem>>, %arg2: memref<32x128xbf16, #tpu.memory_space<vmem>>, %arg3: memref<128x128xbf16, #tpu.memory_space<vmem>>, %arg4: memref<32x128xf32, #tpu.memory_space<vmem>>) attributes {dimension_semantics = [#tpu.dimension_semantics<parallel>], iteration_bounds = array<i64: 1>, scalar_prefetch = 0 : i64, scratch_operands = 0 : i64, tpu.core_type = #tpu.core_type<tc>, window_params = [{transform_indices = @transform_0, window_bounds = array<i64: 32, 32>}, {pipeline_mode = #tpu.pipeline_mode<synchronous>, transform_indices = @transform_1, window_bounds = array<i64: 32, 128>}, {pipeline_mode = #tpu.pipeline_mode<synchronous>, transform_indices = @transform_2, window_bounds = array<i64: 128, 128>}, {transform_indices = @transform_3, window_bounds = array<i64: 32, 128>}]} {
    %c0 = arith.constant 0 : index
    %c0_0 = arith.constant 0 : index
    %0 = vector.load %arg1[%c0, %c0_0] : memref<32x32xf32, #tpu.memory_space<vmem>>, vector<32x32xf32>
    %1 = arith.truncf %0 : vector<32x32xf32> to vector<32x32xbf16>
    %c0_1 = arith.constant 0 : index
    %c0_2 = arith.constant 0 : index
    %2 = vector.load %arg2[%c0_1, %c0_2] : memref<32x128xbf16, #tpu.memory_space<vmem>>, vector<32x128xbf16>
    %cst = arith.constant dense<0.000000e+00> : vector<32x128xf32>
    %3 = tpu.matmul %1, %2, %cst {dimension_numbers = #tpu.dot_dimension_numbers<[1], [0], [0], [1], [0, 0, 1, 1], [], []>} : vector<32x32xbf16>, vector<32x128xbf16>, vector<32x128xf32> -> vector<32x128xf32>
    %4 = arith.truncf %3 : vector<32x128xf32> to vector<32x128xbf16>
    %c0_3 = arith.constant 0 : index
    %c0_4 = arith.constant 0 : index
    %5 = vector.load %arg3[%c0_3, %c0_4] : memref<128x128xbf16, #tpu.memory_space<vmem>>, vector<128x128xbf16>
    %cst_5 = arith.constant dense<0.000000e+00> : vector<32x128xf32>
    %6 = tpu.matmul %4, %5, %cst_5 {dimension_numbers = #tpu.dot_dimension_numbers<[1], [0], [0], [1], [0, 0, 1, 1], [], []>} : vector<32x128xbf16>, vector<128x128xbf16>, vector<32x128xf32> -> vector<32x128xf32>
    %c0_6 = arith.constant 0 : index
    %c0_7 = arith.constant 0 : index
    %7 = vector.load %arg4[%c0_6, %c0_7] : memref<32x128xf32, #tpu.memory_space<vmem>>, vector<32x128xf32>
    tpu.vector_store %arg4[%c0_6, %c0_7], %6 {strides = array<i32>} : memref<32x128xf32, #tpu.memory_space<vmem>>, vector<32x128xf32>,
    return
  }
  func.func @transform_0(%arg0: i32) -> (i32, i32) {
    %c0_i32 = arith.constant 0 : i32
    %c0_i32_0 = arith.constant 0 : i32
    return %arg0, %c0_i32 : i32, i32
  }
  func.func @transform_1(%arg0: i32) -> (i32, i32) {
    %c0_i32 = arith.constant 0 : i32
    %c0_i32_0 = arith.constant 0 : i32
    %c0_i32_1 = arith.constant 0 : i32
    return %c0_i32, %c0_i32_0 : i32, i32
  }
  func.func @transform_2(%arg0: i32) -> (i32, i32) {
    %c0_i32 = arith.constant 0 : i32
    %c0_i32_0 = arith.constant 0 : i32
    %c0_i32_1 = arith.constant 0 : i32
    return %c0_i32, %c0_i32_0 : i32, i32
  }
  func.func @transform_3(%arg0: i32) -> (i32, i32) {
    %c0_i32 = arith.constant 0 : i32
    %c0_i32_0 = arith.constant 0 : i32
    return %arg0, %c0_i32 : i32, i32
  }
}

</mosaic_0001>

<llo_original>
// kernel: tpu_custom_call.1
$region0: #{tpu_custom_call.1}
  #allocation0 [shape = 'u32[]', space=smem, size = 0x4, offset = 0x4, fixed_abs, tag = 'smem constant byte address 0x4 - core index']
  #allocation1 [shape = 'u32[144,128]{1,0:T(1,128)}', space=vmem, size = 0x12000, scoped, tag = 'internal scratch']
  %s0 = inlined_call_operand.hbm [shape: f32[32,32], index: 0, kind: input, shape index: {}]
  %s1 = inlined_call_operand.hbm [shape: bf16[32,128], index: 1, kind: input, shape index: {}]
  %s2 = inlined_call_operand.hbm [shape: bf16[128,128], index: 2, kind: input, shape index: {}]
  %s3 = inlined_call_operand.hbm [shape: f32[32,128], index: 3, kind: output, shape index: {}]
  %s4 = sld [smem:[#allocation0]]
  $region34: #{tpu_custom_call.1} parent=0
    _
  %s6 = ssub.s32 1, %s4
  %s7 = scalar_select 0, %s6, %s4
  $region1: #{tpu_custom_call.1} parent=0
    #allocation2 [shape = 'u8[16384]{0}', space=vmem, size = 0x4000, scoped, tag = 'input window, operand 0, single buffered']
    #allocation3 [shape = 's32[1]{0}', space=sflag, size = 0x4, scoped, tag = 'scoped memory for tpu_custom_call.1']
    #allocation4 [shape = 's32[1]{0}', space=sflag, size = 0x4, scoped, tag = 'scoped memory for tpu_custom_call.1']
    #allocation5 [shape = 'u8[8192]{0}', space=vmem, size = 0x2000, scoped, tag = 'input window, operand 1, single buffered']
    #allocation6 [shape = 's32[1]{0}', space=sflag, size = 0x4, scoped, tag = 'scoped memory for tpu_custom_call.1']
    #allocation7 [shape = 'u8[32768]{0}', space=vmem, size = 0x8000, scoped, tag = 'input window, operand 2, single buffered']
    #allocation8 [shape = 'u8[16384]{0}', space=vmem, size = 0x4000, scoped, tag = 'output window, operand 0, single buffered']
    %8 = vsyncpa [#allocation3], 0
    %9 = vsyncpa [#allocation6], 0
    %10 = vsyncpa [#allocation4], 0
    // Predicated region
    $region2: #{tpu_custom_call.1} parent=1 // pred_check
      _
    $region3: #{tpu_custom_call.1} parent=1 // pred_check_branch
      %12 = sbr.rel (0) target = $region5
    $region4: #{tpu_custom_call.1} parent=1 // pred_region
      %s14 = ssub.s32 512, 512
      %15 = vsyncadd [#allocation3], %s14
      %s16 = sshll.u32 [#allocation2], 4
      %s17 = int_to_ptr.vmem [resolvable:$true] %s16
      %22 = dma.hbm_to_vmem [thread:$0]  %s0, 512, %s17, [#allocation3], 128, 128, 8
    $region5: #{tpu_custom_call.1} parent=1 // pred_fallthru
      _
    // Predicated region
    $region6: #{tpu_custom_call.1} parent=1 // pred_check
      _
    $region7: #{tpu_custom_call.1} parent=1 // pred_check_branch
      %24 = sbr.rel (0) target = $region9
    $region8: #{tpu_custom_call.1} parent=1 // pred_region
      %s26 = ssub.s32 256, 256
      %27 = vsyncadd [#allocation6], %s26
      %s28 = sshll.u32 [#allocation5], 4
      %s29 = int_to_ptr.vmem [resolvable:$true] %s28
      %34 = dma.hbm_to_vmem [thread:$0]  %s1, 256, %s29, [#allocation6], 64, 64, 4
    $region9: #{tpu_custom_call.1} parent=1 // pred_fallthru
      _
    // Predicated region
    $region10: #{tpu_custom_call.1} parent=1 // pred_check
      _
    $region11: #{tpu_custom_call.1} parent=1 // pred_check_branch
      %36 = sbr.rel (0) target = $region13
    $region12: #{tpu_custom_call.1} parent=1 // pred_region
      %s38 = ssub.s32 1024, 1024
      %39 = vsyncadd [#allocation6], %s38
      %s40 = sshll.u32 [#allocation7], 4
      %s41 = int_to_ptr.vmem [resolvable:$true] %s40
      %46 = dma.hbm_to_vmem [thread:$0]  %s2, 1024, %s41, [#allocation6], 64, 64, 4
    $region13: #{tpu_custom_call.1} parent=1 // pred_fallthru
      _
    // Predicated region
    $region14: #{tpu_custom_call.1} parent=1 // pred_check
      _
    $region15: #{tpu_custom_call.1} parent=1 // pred_check_branch
      %48 = sbr.rel (0) target = $region17
    $region16: #{tpu_custom_call.1} parent=1 // pred_region
      %49 = dma.done [#allocation3], 512
    $region17: #{tpu_custom_call.1} parent=1 // pred_fallthru
      _
    // Predicated region
    $region18: #{tpu_custom_call.1} parent=1 // pred_check
      _
    $region19: #{tpu_custom_call.1} parent=1 // pred_check_branch
      %51 = sbr.rel (0) target = $region21
    $region20: #{tpu_custom_call.1} parent=1 // pred_region
      %52 = dma.done [#allocation6], 256
    $region21: #{tpu_custom_call.1} parent=1 // pred_fallthru
      _
    // Predicated region
    $region22: #{tpu_custom_call.1} parent=1 // pred_check
      _
    $region23: #{tpu_custom_call.1} parent=1 // pred_check_branch
      %54 = sbr.rel (0) target = $region25
    $region24: #{tpu_custom_call.1} parent=1 // pred_region
      %55 = dma.done [#allocation6], 1024
    $region25: #{tpu_custom_call.1} parent=1 // pred_fallthru
      _
    %v57 = vld [vmem:[#allocation2] sm:$0xff]
    %v58 = vld [vmem:[#allocation2 + $0x8] sm:$0xff]
    %v59 = vld [vmem:[#allocation2 + $0x10] sm:$0xff]
    %v60 = vld [vmem:[#allocation2 + $0x18] sm:$0xff]
    %v61 = vpack.c.bf16 %v58, %v57
    %v62 = vpack.c.bf16 %v60, %v59
    %v63 = vld [vmem:[#allocation5] sm:$0xf]
    %v64 = vld [vmem:[#allocation5 + $0x4] sm:$0xf]
    %v65 = vld [vmem:[#allocation5 + $0x8] sm:$0xf]
    %v66 = vld [vmem:[#allocation5 + $0xc] sm:$0xf]
    %v71 = vunpack.c.l.b16 %v63
    %v72 = vunpack.c.l.b16 %v64
    %v73 = vunpack.c.l.b16 %v65
    %v74 = vunpack.c.l.b16 %v66
    %v75 = vpack.c.b16 %v72, %v71
    %v76 = vpack.c.b16 %v74, %v73
    %vm79 = vcmask 261120
    %v81 = vsel %vm79, %v61, 0
    %v84 = vsel %vm79, %v62, 0
    %86 = vmatprep.subr.bf16.mxu0 0
    %87 = vmatpush1.bf16.msra.mxu0 0
    %88 = vmatprep.subr.bf16.mxu0 0
    %89 = vmatpush1.bf16.msra.mxu0 0
    %90 = vmatprep.subr.bf16.mxu0 0
    %91 = vmatpush1.bf16.msra.mxu0 0
    %92 = vmatprep.subr.bf16.mxu0 0
    %93 = vmatpush1.bf16.msra.mxu0 0
    %94 = vmatprep.subr.bf16.mxu0 0
    %95 = vmatpush1.bf16.msra.mxu0 0
    %96 = vmatprep.subr.bf16.mxu0 0
    %97 = vmatpush1.bf16.msra.mxu0 0
    %98 = vmatprep.subr.bf16.mxu0 0
    %99 = vmatpush1.bf16.msra.mxu0 %v76
    %100 = vmatprep.subr.bf16.mxu0 0
    %101 = vmatpush1.bf16.msra.mxu0 %v75
    %102 = vmatprep.subr.bf16.mxu0 0
    %103 = vmatpush2.bf16.msra.mxu0 0
    %104 = vmatprep.subr.bf16.mxu0 0
    %105 = vmatpush2.bf16.msra.mxu0 0
    %106 = vmatprep.subr.bf16.mxu0 0
    %107 = vmatpush2.bf16.msra.mxu0 0
    %108 = vmatprep.subr.bf16.mxu0 0
    %109 = vmatpush2.bf16.msra.mxu0 0
    %110 = vmatprep.subr.bf16.mxu0 0
    %111 = vmatpush2.bf16.msra.mxu0 0
    %112 = vmatprep.subr.bf16.mxu0 0
    %113 = vmatpush2.bf16.msra.mxu0 0
    %114 = vmatprep.subr.bf16.mxu0 0
    %115 = vmatpush2.bf16.msra.mxu0 0
    %116 = vmatprep.subr.bf16.mxu0 0
    %117 = vmatpush2.bf16.msra.mxu0 0
    %118 = vmatprep.mubr.bf16.mxu0 0
    %119 = vmatmul.mubr.bf16.gmra.mxu0 %v81
    %v120 = vpop.f32.mrf.mxu0
    %v121 = vadd.f32 0.0, %v120
    %v122 = vpop.f32.mrf.mxu0
    %v123 = vpop.f32.mrf.mxu0
    %v124 = vadd.f32 0.0, %v123
    %v125 = vpop.f32.mrf.mxu0
    %126 = vmatprep.mubr.bf16.mxu0 0
    %127 = vmatmul.mubr.bf16.gmra.mxu0 %v84
    %v128 = vpop.f32.mrf.mxu0
    %v129 = vadd.f32 0.0, %v128
    %v130 = vpop.f32.mrf.mxu0
    %v131 = vpop.f32.mrf.mxu0
    %v132 = vadd.f32 0.0, %v131
    %v133 = vpop.f32.mrf.mxu0
    %134 = vdwg.mxu0
    %v135 = vpack.c.bf16 %v124, %v121
    %v136 = vpack.c.bf16 %v132, %v129
    %v137 = vld [vmem:[#allocation7] sm:$0xf]
    %v138 = vld [vmem:[#allocation7 + $0x4] sm:$0xf]
    %v139 = vld [vmem:[#allocation7 + $0x8] sm:$0xf]
    %v140 = vld [vmem:[#allocation7 + $0xc] sm:$0xf]
    %v141 = vld [vmem:[#allocation7 + $0x10] sm:$0xf]
    %v142 = vld [vmem:[#allocation7 + $0x14] sm:$0xf]
    %v143 = vld [vmem:[#allocation7 + $0x18] sm:$0xf]
    %v144 = vld [vmem:[#allocation7 + $0x1c] sm:$0xf]
    %v145 = vld [vmem:[#allocation7 + $0x20] sm:$0xf]
    %v146 = vld [vmem:[#allocation7 + $0x24] sm:$0xf]
    %v147 = vld [vmem:[#allocation7 + $0x28] sm:$0xf]
    %v148 = vld [vmem:[#allocation7 + $0x2c] sm:$0xf]
    %v149 = vld [vmem:[#allocation7 + $0x30] sm:$0xf]
    %v150 = vld [vmem:[#allocation7 + $0x34] sm:$0xf]
    %v151 = vld [vmem:[#allocation7 + $0x38] sm:$0xf]
    %v152 = vld [vmem:[#allocation7 + $0x3c] sm:$0xf]
    %v169 = vunpack.c.l.b16 %v137
    %v170 = vunpack.c.l.b16 %v138
    %v171 = vunpack.c.l.b16 %v139
    %v172 = vunpack.c.l.b16 %v140
    %v173 = vunpack.c.l.b16 %v141
    %v174 = vunpack.c.l.b16 %v142
    %v175 = vunpack.c.l.b16 %v143
    %v176 = vunpack.c.l.b16 %v144
    %v177 = vunpack.c.l.b16 %v145
    %v178 = vunpack.c.l.b16 %v146
    %v179 = vunpack.c.l.b16 %v147
    %v180 = vunpack.c.l.b16 %v148
    %v181 = vunpack.c.l.b16 %v149
    %v182 = vunpack.c.l.b16 %v150
    %v183 = vunpack.c.l.b16 %v151
    %v184 = vunpack.c.l.b16 %v152
    %v185 = vpack.c.b16 %v170, %v169
    %v186 = vpack.c.b16 %v172, %v171
    %v187 = vpack.c.b16 %v174, %v173
    %v188 = vpack.c.b16 %v176, %v175
    %v189 = vpack.c.b16 %v178, %v177
    %v190 = vpack.c.b16 %v180, %v179
    %v191 = vpack.c.b16 %v182, %v181
    %v192 = vpack.c.b16 %v184, %v183
    %201 = vmatprep.subr.bf16.mxu0 0
    %202 = vmatpush1.bf16.msra.mxu0 %v192
    %203 = vmatprep.subr.bf16.mxu0 0
    %204 = vmatpush1.bf16.msra.mxu0 %v191
    %205 = vmatprep.subr.bf16.mxu0 0
    %206 = vmatpush1.bf16.msra.mxu0 %v190
    %207 = vmatprep.subr.bf16.mxu0 0
    %208 = vmatpush1.bf16.msra.mxu0 %v189
    %209 = vmatprep.subr.bf16.mxu0 0
    %210 = vmatpush1.bf16.msra.mxu0 %v188
    %211 = vmatprep.subr.bf16.mxu0 0
    %212 = vmatpush1.bf16.msra.mxu0 %v187
    %213 = vmatprep.subr.bf16.mxu0 0
    %214 = vmatpush1.bf16.msra.mxu0 %v186
    %215 = vmatprep.subr.bf16.mxu0 0
    %216 = vmatpush1.bf16.msra.mxu0 %v185
    %217 = vmatprep.subr.bf16.mxu0 0
    %218 = vmatpush2.bf16.msra.mxu0 0
    %219 = vmatprep.subr.bf16.mxu0 0
    %220 = vmatpush2.bf16.msra.mxu0 0
    %221 = vmatprep.subr.bf16.mxu0 0
    %222 = vmatpush2.bf16.msra.mxu0 0
    %223 = vmatprep.subr.bf16.mxu0 0
    %224 = vmatpush2.bf16.msra.mxu0 0
    %225 = vmatprep.subr.bf16.mxu0 0
    %226 = vmatpush2.bf16.msra.mxu0 0
    %227 = vmatprep.subr.bf16.mxu0 0
    %228 = vmatpush2.bf16.msra.mxu0 0
    %229 = vmatprep.subr.bf16.mxu0 0
    %230 = vmatpush2.bf16.msra.mxu0 0
    %231 = vmatprep.subr.bf16.mxu0 0
    %232 = vmatpush2.bf16.msra.mxu0 0
    %233 = vmatprep.mubr.bf16.mxu0 0
    %234 = vmatmul.mubr.bf16.gmra.mxu0 %v135
    %v235 = vpop.f32.mrf.mxu0
    %v236 = vadd.f32 0.0, %v235
    %v237 = vpop.f32.mrf.mxu0
    %v238 = vpop.f32.mrf.mxu0
    %v239 = vadd.f32 0.0, %v238
    %v240 = vpop.f32.mrf.mxu0
    %241 = vmatprep.mubr.bf16.mxu0 0
    %242 = vmatmul.mubr.bf16.gmra.mxu0 %v136
    %v243 = vpop.f32.mrf.mxu0
    %v244 = vadd.f32 0.0, %v243
    %v245 = vpop.f32.mrf.mxu0
    %v246 = vpop.f32.mrf.mxu0
    %v247 = vadd.f32 0.0, %v246
    %v248 = vpop.f32.mrf.mxu0
    %249 = vdwg.mxu0
    %250 = vst [vmem:[#allocation8] sm:$0xff] %v236
    %251 = vst [vmem:[#allocation8 + $0x8] sm:$0xff] %v239
    %252 = vst [vmem:[#allocation8 + $0x10] sm:$0xff] %v244
    %253 = vst [vmem:[#allocation8 + $0x18] sm:$0xff] %v247
    // Predicated region
    $region26: #{tpu_custom_call.1} parent=1 // pred_check
      _
    $region27: #{tpu_custom_call.1} parent=1 // pred_check_branch
      %255 = sbr.rel (0) target = $region29
    $region28: #{tpu_custom_call.1} parent=1 // pred_region
      %s257 = ssub.s32 512, 512
      %258 = vsyncadd [#allocation4], %s257
      %s259 = sshll.u32 [#allocation8], 4
      %s260 = int_to_ptr.vmem [resolvable:$true] %s259
      %265 = dma.vmem_to_hbm [thread:$0]  %s260, 512, %s3, [#allocation4], 128, 128, 8
    $region29: #{tpu_custom_call.1} parent=1 // pred_fallthru
      _
    // Predicated region
    $region30: #{tpu_custom_call.1} parent=1 // pred_check
      _
    $region31: #{tpu_custom_call.1} parent=1 // pred_check_branch
      %267 = sbr.rel (0) target = $region33
    $region32: #{tpu_custom_call.1} parent=1 // pred_region
      %268 = dma.done [#allocation4], 512
    $region33: #{tpu_custom_call.1} parent=1 // pred_fallthru
      _
    %269 = vsyncpa [#allocation3], 1
    %270 = vsyncpa [#allocation6], 1
    %271 = vsyncpa [#allocation4], 1

</llo_original>
